<compile_context>
chip_gen: v7x
topology: tpu7x:2x2x1
jax: 0.10.0
libtpu: 0.0.40
codegen_flags: <defaults>
</compile_context>

<pallas_src>
import jax
import jax.numpy as jnp
from jax.experimental import pallas as pl
from jax.experimental.pallas import tpu as pltpu

H1 = 32
H2 = 16
LANE = 128


def _round_up(n, m):
    return ((n + m - 1) // m) * m


def mlp_kernel(x_ref, w1_ref, b1_ref, w2_ref, b2_ref, w3_ref, b3_ref, o_ref):
    # Layer 1: Linear(input_dim -> 32) + ReLU. bf16 MXU inputs, f32 accumulate.
    x = x_ref[...]                                                # (TB, in) bf16
    h1 = jnp.dot(x, w1_ref[...], preferred_element_type=jnp.float32) + b1_ref[...]
    h1 = jnp.maximum(h1, 0.0)                                     # f32 (VPU)

    # Layer 2: Linear(32 -> 16) + ReLU.
    h2 = jnp.dot(h1.astype(jnp.bfloat16), w2_ref[...],
                 preferred_element_type=jnp.float32) + b2_ref[...]
    h2 = jnp.maximum(h2, 0.0)                                     # f32 (VPU)

    # Layer 3: Linear(16 -> out_padded) -- lane-dense (128-wide) output store.
    out = jnp.dot(h2.astype(jnp.bfloat16), w3_ref[...],
                  preferred_element_type=jnp.float32) + b3_ref[...]
    o_ref[...] = out.astype(o_ref.dtype)


def custom_mlp_forward(x, params, *, tile_b=4096):
    """Fused 3-layer MLP.  x: [B, input_dim] f32 -> [B, output_dim] f32.

    Weights are stored [in_features, out_features] so y = x @ W + b, which is
    equivalent to PyTorch's x @ W.T + b with its [out, in] convention.
    """
    B, in_dim = x.shape
    out_dim = params["w3"].shape[1]
    out_p = _round_up(out_dim, LANE)            # lane-dense output width

    # Stream x / weights as bf16 (halves HBM traffic); biases stay f32.
    xb = x.astype(jnp.bfloat16)
    w1 = params["w1"].astype(jnp.bfloat16)
    w2 = params["w2"].astype(jnp.bfloat16)
    b1 = params["b1"].astype(jnp.float32)
    b2 = params["b2"].astype(jnp.float32)
    # Pad the last layer out to the 128-lane width (extra columns are zeros).
    w3 = jnp.zeros((params["w3"].shape[0], out_p), jnp.bfloat16)
    w3 = w3.at[:, :out_dim].set(params["w3"].astype(jnp.bfloat16))
    b3 = jnp.zeros((1, out_p), jnp.float32)
    b3 = b3.at[:, :out_dim].set(params["b3"].astype(jnp.float32))

    # Batch tiling: large tiles amortize per-step overhead; pad B with zero rows.
    tb = min(tile_b, _round_up(B, 16))
    b_pad = _round_up(B, tb)
    if b_pad != B:
        xb = jnp.pad(xb, ((0, b_pad - B), (0, 0)))
    grid = (b_pad // tb,)

    def resident(a):
        # Full-array block with constant index_map -> DMA'd once, VMEM-resident.
        return pl.BlockSpec(a.shape, lambda i: (0,) * a.ndim)

    flops = 2 * b_pad * (in_dim * H1 + H1 * H2 + H2 * out_p)
    bytes_accessed = (xb.size * 2 + b_pad * out_p * 4
                      + (w1.size + w2.size + w3.size) * 2
                      + (b1.size + b2.size + b3.size) * 4)

    out = pl.pallas_call(
        mlp_kernel,
        out_shape=jax.ShapeDtypeStruct((b_pad, out_p), jnp.float32),
        grid_spec=pltpu.PrefetchScalarGridSpec(
            num_scalar_prefetch=0,
            grid=grid,
            in_specs=[
                pl.BlockSpec((tb, in_dim), lambda i: (i, 0)),   # streamed x tiles
                resident(w1), resident(b1),
                resident(w2), resident(b2),
                resident(w3), resident(b3),
            ],
            out_specs=pl.BlockSpec((tb, out_p), lambda i: (i, 0)),
        ),
        compiler_params=pltpu.CompilerParams(
            dimension_semantics=("parallel",),          # megacore / v7x 2-TC
            vmem_limit_bytes=64 * 1024 * 1024,
        ),
        cost_estimate=pl.CostEstimate(
            flops=flops, transcendentals=0, bytes_accessed=bytes_accessed),
    )(xb, w1, b1, w2, b2, w3, b3)

    return out[:B, :out_dim]


def init_params(key, input_dim, output_dim):
    """Deterministic synthetic init (uniform like PyTorch's default Linear init)."""
    ks = jax.random.split(key, 6)

    def linear_init(kw, kb, fan_in, fan_out):
        bound = 1.0 / jnp.sqrt(fan_in)
        w = jax.random.uniform(kw, (fan_in, fan_out), jnp.float32, -bound, bound)
        b = jax.random.uniform(kb, (1, fan_out), jnp.float32, -bound, bound)
        return w, b

    w1, b1 = linear_init(ks[0], ks[1], input_dim, H1)
    w2, b2 = linear_init(ks[2], ks[3], H1, H2)
    w3, b3 = linear_init(ks[4], ks[5], H2, output_dim)
    return dict(w1=w1, b1=b1, w2=w2, b2=b2, w3=w3, b3=b3)


def reference_forward(x, p):
    """Pure-JAX reference matching the kernel's numerics (bf16 operands, f32 accum)."""
    bf = lambda a: a.astype(jnp.bfloat16).astype(jnp.float32)
    h1 = jnp.maximum(bf(x) @ bf(p["w1"]) + p["b1"], 0.0)
    h2 = jnp.maximum(bf(h1) @ bf(p["w2"]) + p["b2"], 0.0)
    return bf(h2) @ bf(p["w3"]) + p["b3"]


if __name__ == "__main__":
    key = jax.random.PRNGKey(0)
    k_x, k_p, k_x2 = jax.random.split(key, 3)

    batch, input_dim, output_dim = 8, 16, 4
    x = jax.random.normal(k_x, (batch, input_dim), jnp.float32)
    params = init_params(k_p, input_dim, output_dim)

    out = jax.block_until_ready(custom_mlp_forward(x, params))
    ref = reference_forward(x, params)
    assert out.shape == (batch, output_dim)
    assert jnp.allclose(out, ref, atol=1e-2, rtol=1e-2)

    # Also exercise the multi-tile (grid > 1) path with a tiny tile size.
    x2 = jax.random.normal(k_x2, (40, input_dim), jnp.float32)
    out2 = jax.block_until_ready(custom_mlp_forward(x2, params, tile_b=16))
    ref2 = reference_forward(x2, params)
    assert out2.shape == (40, output_dim)
    assert jnp.allclose(out2, ref2, atol=1e-2, rtol=1e-2)

    print("KERNEL_OK")
</pallas_src>

<mosaic_0001>
module attributes {stable_mosaic.version = 11 : i64} {
  func.func @mlp_kernel(%arg0: i32, %arg1: memref<16x16xbf16, #tpu.memory_space<vmem>>, %arg2: memref<16x32xbf16, #tpu.memory_space<vmem>>, %arg3: memref<1x32xf32, #tpu.memory_space<vmem>>, %arg4: memref<32x16xbf16, #tpu.memory_space<vmem>>, %arg5: memref<1x16xf32, #tpu.memory_space<vmem>>, %arg6: memref<16x128xbf16, #tpu.memory_space<vmem>>, %arg7: memref<1x128xf32, #tpu.memory_space<vmem>>, %arg8: memref<16x128xf32, #tpu.memory_space<vmem>>) attributes {dimension_semantics = [#tpu.dimension_semantics<parallel>], iteration_bounds = array<i64: 1>, scalar_prefetch = 0 : i64, scratch_operands = 0 : i64, tpu.core_type = #tpu.core_type<tc>, window_params = [{transform_indices = @transform_0, window_bounds = array<i64: 16, 16>}, {pipeline_mode = #tpu.pipeline_mode<synchronous>, transform_indices = @transform_1, window_bounds = array<i64: 16, 32>}, {pipeline_mode = #tpu.pipeline_mode<synchronous>, transform_indices = @transform_2, window_bounds = array<i64: 1, 32>}, {pipeline_mode = #tpu.pipeline_mode<synchronous>, transform_indices = @transform_3, window_bounds = array<i64: 32, 16>}, {pipeline_mode = #tpu.pipeline_mode<synchronous>, transform_indices = @transform_4, window_bounds = array<i64: 1, 16>}, {pipeline_mode = #tpu.pipeline_mode<synchronous>, transform_indices = @transform_5, window_bounds = array<i64: 16, 128>}, {pipeline_mode = #tpu.pipeline_mode<synchronous>, transform_indices = @transform_6, window_bounds = array<i64: 1, 128>}, {transform_indices = @transform_7, window_bounds = array<i64: 16, 128>}]} {
    %c0 = arith.constant 0 : index
    %c0_0 = arith.constant 0 : index
    %0 = vector.load %arg1[%c0, %c0_0] : memref<16x16xbf16, #tpu.memory_space<vmem>>, vector<16x16xbf16>
    %c0_1 = arith.constant 0 : index
    %c0_2 = arith.constant 0 : index
    %1 = vector.load %arg2[%c0_1, %c0_2] : memref<16x32xbf16, #tpu.memory_space<vmem>>, vector<16x32xbf16>
    %cst = arith.constant dense<0.000000e+00> : vector<16x32xf32>
    %2 = tpu.matmul %0, %1, %cst {dimension_numbers = #tpu.dot_dimension_numbers<[1], [0], [0], [1], [0, 0, 1, 1], [], []>} : vector<16x16xbf16>, vector<16x32xbf16>, vector<16x32xf32> -> vector<16x32xf32>
    %c0_3 = arith.constant 0 : index
    %c0_4 = arith.constant 0 : index
    %3 = vector.load %arg3[%c0_3, %c0_4] : memref<1x32xf32, #tpu.memory_space<vmem>>, vector<1x32xf32>
    %4 = vector.broadcast %3 : vector<1x32xf32> to vector<16x32xf32>
    %5 = arith.addf %2, %4 : vector<16x32xf32>
    %cst_5 = arith.constant 0.000000e+00 : f32
    %6 = vector.broadcast %cst_5 : f32 to vector<16x32xf32>
    %7 = arith.maximumf %5, %6 : vector<16x32xf32>
    %8 = arith.truncf %7 : vector<16x32xf32> to vector<16x32xbf16>
    %c0_6 = arith.constant 0 : index
    %c0_7 = arith.constant 0 : index
    %9 = vector.load %arg4[%c0_6, %c0_7] : memref<32x16xbf16, #tpu.memory_space<vmem>>, vector<32x16xbf16>
    %cst_8 = arith.constant dense<0.000000e+00> : vector<16x16xf32>
    %10 = tpu.matmul %8, %9, %cst_8 {dimension_numbers = #tpu.dot_dimension_numbers<[1], [0], [0], [1], [0, 0, 1, 1], [], []>} : vector<16x32xbf16>, vector<32x16xbf16>, vector<16x16xf32> -> vector<16x16xf32>
    %c0_9 = arith.constant 0 : index
    %c0_10 = arith.constant 0 : index
    %11 = vector.load %arg5[%c0_9, %c0_10] : memref<1x16xf32, #tpu.memory_space<vmem>>, vector<1x16xf32>
    %12 = vector.broadcast %11 : vector<1x16xf32> to vector<16x16xf32>
    %13 = arith.addf %10, %12 : vector<16x16xf32>
    %cst_11 = arith.constant 0.000000e+00 : f32
    %14 = vector.broadcast %cst_11 : f32 to vector<16x16xf32>
    %15 = arith.maximumf %13, %14 : vector<16x16xf32>
    %16 = arith.truncf %15 : vector<16x16xf32> to vector<16x16xbf16>
    %c0_12 = arith.constant 0 : index
    %c0_13 = arith.constant 0 : index
    %17 = vector.load %arg6[%c0_12, %c0_13] : memref<16x128xbf16, #tpu.memory_space<vmem>>, vector<16x128xbf16>
    %cst_14 = arith.constant dense<0.000000e+00> : vector<16x128xf32>
    %18 = tpu.matmul %16, %17, %cst_14 {dimension_numbers = #tpu.dot_dimension_numbers<[1], [0], [0], [1], [0, 0, 1, 1], [], []>} : vector<16x16xbf16>, vector<16x128xbf16>, vector<16x128xf32> -> vector<16x128xf32>
    %c0_15 = arith.constant 0 : index
    %c0_16 = arith.constant 0 : index
    %19 = vector.load %arg7[%c0_15, %c0_16] : memref<1x128xf32, #tpu.memory_space<vmem>>, vector<1x128xf32>
    %20 = vector.broadcast %19 : vector<1x128xf32> to vector<16x128xf32>
    %21 = arith.addf %18, %20 : vector<16x128xf32>
    %c0_17 = arith.constant 0 : index
    %c0_18 = arith.constant 0 : index
    %22 = vector.load %arg8[%c0_17, %c0_18] : memref<16x128xf32, #tpu.memory_space<vmem>>, vector<16x128xf32>
    tpu.vector_store %arg8[%c0_17, %c0_18], %21 {strides = array<i32>} : memref<16x128xf32, #tpu.memory_space<vmem>>, vector<16x128xf32>,
    return
  }
  func.func @transform_0(%arg0: i32) -> (i32, i32) {
    %c0_i32 = arith.constant 0 : i32
    %c0_i32_0 = arith.constant 0 : i32
    return %arg0, %c0_i32 : i32, i32
  }
  func.func @transform_1(%arg0: i32) -> (i32, i32) {
    %c0_i32 = arith.constant 0 : i32
    %c0_i32_0 = arith.constant 0 : i32
    %c0_i32_1 = arith.constant 0 : i32
    return %c0_i32, %c0_i32_0 : i32, i32
  }
  func.func @transform_2(%arg0: i32) -> (i32, i32) {
    %c0_i32 = arith.constant 0 : i32
    %c0_i32_0 = arith.constant 0 : i32
    %c0_i32_1 = arith.constant 0 : i32
    return %c0_i32, %c0_i32_0 : i32, i32
  }
  func.func @transform_3(%arg0: i32) -> (i32, i32) {
    %c0_i32 = arith.constant 0 : i32
    %c0_i32_0 = arith.constant 0 : i32
    %c0_i32_1 = arith.constant 0 : i32
    return %c0_i32, %c0_i32_0 : i32, i32
  }
  func.func @transform_4(%arg0: i32) -> (i32, i32) {
    %c0_i32 = arith.constant 0 : i32
    %c0_i32_0 = arith.constant 0 : i32
    %c0_i32_1 = arith.constant 0 : i32
    return %c0_i32, %c0_i32_0 : i32, i32
  }
  func.func @transform_5(%arg0: i32) -> (i32, i32) {
    %c0_i32 = arith.constant 0 : i32
    %c0_i32_0 = arith.constant 0 : i32
    %c0_i32_1 = arith.constant 0 : i32
    return %c0_i32, %c0_i32_0 : i32, i32
  }
  func.func @transform_6(%arg0: i32) -> (i32, i32) {
    %c0_i32 = arith.constant 0 : i32
    %c0_i32_0 = arith.constant 0 : i32
    %c0_i32_1 = arith.constant 0 : i32
    return %c0_i32, %c0_i32_0 : i32, i32
  }
  func.func @transform_7(%arg0: i32) -> (i32, i32) {
    %c0_i32 = arith.constant 0 : i32
    %c0_i32_0 = arith.constant 0 : i32
    return %arg0, %c0_i32 : i32, i32
  }
}

</mosaic_0001>

<llo_original>
// kernel: tpu_custom_call.1
$region0: #{tpu_custom_call.1}
  #allocation0 [shape = 'u32[]', space=smem, size = 0x4, offset = 0x4, fixed_abs, tag = 'smem constant byte address 0x4 - core index']
  #allocation1 [shape = 'u32[144,128]{1,0:T(1,128)}', space=vmem, size = 0x12000, scoped, tag = 'internal scratch']
  %s0 = inlined_call_operand.hbm [shape: bf16[16,16], index: 0, kind: input, shape index: {}]
  %s1 = inlined_call_operand.hbm [shape: bf16[16,32], index: 1, kind: input, shape index: {}]
  %s2 = inlined_call_operand.hbm [shape: f32[1,32], index: 2, kind: input, shape index: {}]
  %s3 = inlined_call_operand.hbm [shape: bf16[32,16], index: 3, kind: input, shape index: {}]
  %s4 = inlined_call_operand.hbm [shape: f32[1,16], index: 4, kind: input, shape index: {}]
  %s5 = inlined_call_operand.hbm [shape: bf16[16,128], index: 5, kind: input, shape index: {}]
  %s6 = inlined_call_operand.hbm [shape: f32[1,128], index: 6, kind: input, shape index: {}]
  %s7 = inlined_call_operand.hbm [shape: f32[16,128], index: 7, kind: output, shape index: {}]
  %s8 = sld [smem:[#allocation0]]
  $region66: #{tpu_custom_call.1} parent=0
    _
  %s10 = ssub.s32 1, %s8
  %s11 = scalar_select 0, %s10, %s8
  $region1: #{tpu_custom_call.1} parent=0
    #allocation2 [shape = 'u8[4096]{0}', space=vmem, size = 0x1000, scoped, tag = 'input window, operand 0, single buffered']
    #allocation3 [shape = 's32[1]{0}', space=sflag, size = 0x4, scoped, tag = 'scoped memory for tpu_custom_call.1']
    #allocation4 [shape = 's32[1]{0}', space=sflag, size = 0x4, scoped, tag = 'scoped memory for tpu_custom_call.1']
    #allocation5 [shape = 'u8[4096]{0}', space=vmem, size = 0x1000, scoped, tag = 'input window, operand 1, single buffered']
    #allocation6 [shape = 's32[1]{0}', space=sflag, size = 0x4, scoped, tag = 'scoped memory for tpu_custom_call.1']
    #allocation7 [shape = 'u8[512]{0}', space=vmem, size = 0x400, scoped, tag = 'input window, operand 2, single buffered']
    #allocation8 [shape = 'u8[8192]{0}', space=vmem, size = 0x2000, scoped, tag = 'input window, operand 3, single buffered']
    #allocation9 [shape = 's32[1]{0}', space=sflag, size = 0x4, scoped, tag = 'scoped memory for tpu_custom_call.1']
    #allocation10 [shape = 'u8[512]{0}', space=vmem, size = 0x400, scoped, tag = 'input window, operand 4, single buffered']
    #allocation11 [shape = 'u8[4096]{0}', space=vmem, size = 0x1000, scoped, tag = 'input window, operand 5, single buffered']
    #allocation12 [shape = 's32[1]{0}', space=sflag, size = 0x4, scoped, tag = 'scoped memory for tpu_custom_call.1']
    #allocation13 [shape = 'u8[512]{0}', space=vmem, size = 0x400, scoped, tag = 'input window, operand 6, single buffered']
    #allocation14 [shape = 'u8[8192]{0}', space=vmem, size = 0x2000, scoped, tag = 'output window, operand 0, single buffered']
    %12 = vsyncpa [#allocation3], 0
    %13 = vsyncpa [#allocation6], 0
    %14 = vsyncpa [#allocation9], 0
    %15 = vsyncpa [#allocation12], 0
    %16 = vsyncpa [#allocation4], 0
    // Predicated region
    $region2: #{tpu_custom_call.1} parent=1 // pred_check
      _
    $region3: #{tpu_custom_call.1} parent=1 // pred_check_branch
      %18 = sbr.rel (0) target = $region5
    $region4: #{tpu_custom_call.1} parent=1 // pred_region
      %s20 = ssub.s32 128, 128
      %21 = vsyncadd [#allocation3], %s20
      %s22 = sshll.u32 [#allocation2], 4
      %s23 = int_to_ptr.vmem [resolvable:$true] %s22
      %28 = dma.hbm_to_vmem [thread:$0]  %s0, 128, %s23, [#allocation3], 64, 64, 4
    $region5: #{tpu_custom_call.1} parent=1 // pred_fallthru
      _
    // Predicated region
    $region6: #{tpu_custom_call.1} parent=1 // pred_check
      _
    $region7: #{tpu_custom_call.1} parent=1 // pred_check_branch
      %30 = sbr.rel (0) target = $region9
    $region8: #{tpu_custom_call.1} parent=1 // pred_region
      %s32 = ssub.s32 128, 128
      %33 = vsyncadd [#allocation6], %s32
      %s34 = sshll.u32 [#allocation5], 4
      %s35 = int_to_ptr.vmem [resolvable:$true] %s34
      %40 = dma.hbm_to_vmem [thread:$0]  %s1, 128, %s35, [#allocation6], 64, 64, 4
    $region9: #{tpu_custom_call.1} parent=1 // pred_fallthru
      _
    // Predicated region
    $region10: #{tpu_custom_call.1} parent=1 // pred_check
      _
    $region11: #{tpu_custom_call.1} parent=1 // pred_check_branch
      %42 = sbr.rel (0) target = $region13
    $region12: #{tpu_custom_call.1} parent=1 // pred_region
      %s44 = ssub.s32 16, 16
      %45 = vsyncadd [#allocation6], %s44
      %s47 = sshll.u32 [#allocation7], 4
      %s48 = int_to_ptr.vmem [resolvable:$true] %s47
      %50 = dma.hbm_to_vmem [thread:$0]  %s2, 16, %s48, [#allocation6]
    $region13: #{tpu_custom_call.1} parent=1 // pred_fallthru
      _
    // Predicated region
    $region14: #{tpu_custom_call.1} parent=1 // pred_check
      _
    $region15: #{tpu_custom_call.1} parent=1 // pred_check_branch
      %52 = sbr.rel (0) target = $region17
    $region16: #{tpu_custom_call.1} parent=1 // pred_region
      %s54 = ssub.s32 256, 256
      %55 = vsyncadd [#allocation9], %s54
      %s56 = sshll.u32 [#allocation8], 4
      %s57 = int_to_ptr.vmem [resolvable:$true] %s56
      %62 = dma.hbm_to_vmem [thread:$0]  %s3, 256, %s57, [#allocation9], 64, 64, 4
    $region17: #{tpu_custom_call.1} parent=1 // pred_fallthru
      _
    // Predicated region
    $region18: #{tpu_custom_call.1} parent=1 // pred_check
      _
    $region19: #{tpu_custom_call.1} parent=1 // pred_check_branch
      %64 = sbr.rel (0) target = $region21
    $region20: #{tpu_custom_call.1} parent=1 // pred_region
      %s66 = ssub.s32 16, 16
      %67 = vsyncadd [#allocation9], %s66
      %s69 = sshll.u32 [#allocation10], 4
      %s70 = int_to_ptr.vmem [resolvable:$true] %s69
      %72 = dma.hbm_to_vmem [thread:$0]  %s4, 16, %s70, [#allocation9]
    $region21: #{tpu_custom_call.1} parent=1 // pred_fallthru
      _
    // Predicated region
    $region22: #{tpu_custom_call.1} parent=1 // pred_check
      _
    $region23: #{tpu_custom_call.1} parent=1 // pred_check_branch
      %74 = sbr.rel (0) target = $region25
    $region24: #{tpu_custom_call.1} parent=1 // pred_region
      %s76 = ssub.s32 128, 128
      %77 = vsyncadd [#allocation12], %s76
      %s78 = sshll.u32 [#allocation11], 4
      %s79 = int_to_ptr.vmem [resolvable:$true] %s78
      %84 = dma.hbm_to_vmem [thread:$0]  %s5, 128, %s79, [#allocation12], 64, 64, 4
    $region25: #{tpu_custom_call.1} parent=1 // pred_fallthru
      _
    // Predicated region
    $region26: #{tpu_custom_call.1} parent=1 // pred_check
      _
    $region27: #{tpu_custom_call.1} parent=1 // pred_check_branch
      %86 = sbr.rel (0) target = $region29
    $region28: #{tpu_custom_call.1} parent=1 // pred_region
      %s88 = ssub.s32 16, 16
      %89 = vsyncadd [#allocation12], %s88
      %s91 = sshll.u32 [#allocation13], 4
      %s92 = int_to_ptr.vmem [resolvable:$true] %s91
      %94 = dma.hbm_to_vmem [thread:$0]  %s6, 16, %s92, [#allocation12]
    $region29: #{tpu_custom_call.1} parent=1 // pred_fallthru
      _
    // Predicated region
    $region30: #{tpu_custom_call.1} parent=1 // pred_check
      _
    $region31: #{tpu_custom_call.1} parent=1 // pred_check_branch
      %96 = sbr.rel (0) target = $region33
    $region32: #{tpu_custom_call.1} parent=1 // pred_region
      %97 = dma.done [#allocation3], 128
    $region33: #{tpu_custom_call.1} parent=1 // pred_fallthru
      _
    // Predicated region
    $region34: #{tpu_custom_call.1} parent=1 // pred_check
      _
    $region35: #{tpu_custom_call.1} parent=1 // pred_check_branch
      %99 = sbr.rel (0) target = $region37
    $region36: #{tpu_custom_call.1} parent=1 // pred_region
      %100 = dma.done [#allocation6], 128
    $region37: #{tpu_custom_call.1} parent=1 // pred_fallthru
      _
    // Predicated region
    $region38: #{tpu_custom_call.1} parent=1 // pred_check
      _
    $region39: #{tpu_custom_call.1} parent=1 // pred_check_branch
      %102 = sbr.rel (0) target = $region41
    $region40: #{tpu_custom_call.1} parent=1 // pred_region
      %103 = dma.done [#allocation6], 16
    $region41: #{tpu_custom_call.1} parent=1 // pred_fallthru
      _
    // Predicated region
    $region42: #{tpu_custom_call.1} parent=1 // pred_check
      _
    $region43: #{tpu_custom_call.1} parent=1 // pred_check_branch
      %105 = sbr.rel (0) target = $region45
    $region44: #{tpu_custom_call.1} parent=1 // pred_region
      %106 = dma.done [#allocation9], 256
    $region45: #{tpu_custom_call.1} parent=1 // pred_fallthru
      _
    // Predicated region
    $region46: #{tpu_custom_call.1} parent=1 // pred_check
      _
    $region47: #{tpu_custom_call.1} parent=1 // pred_check_branch
      %108 = sbr.rel (0) target = $region49
    $region48: #{tpu_custom_call.1} parent=1 // pred_region
      %109 = dma.done [#allocation9], 16
    $region49: #{tpu_custom_call.1} parent=1 // pred_fallthru
      _
    // Predicated region
    $region50: #{tpu_custom_call.1} parent=1 // pred_check
      _
    $region51: #{tpu_custom_call.1} parent=1 // pred_check_branch
      %111 = sbr.rel (0) target = $region53
    $region52: #{tpu_custom_call.1} parent=1 // pred_region
      %112 = dma.done [#allocation12], 128
    $region53: #{tpu_custom_call.1} parent=1 // pred_fallthru
      _
    // Predicated region
    $region54: #{tpu_custom_call.1} parent=1 // pred_check
      _
    $region55: #{tpu_custom_call.1} parent=1 // pred_check_branch
      %114 = sbr.rel (0) target = $region57
    $region56: #{tpu_custom_call.1} parent=1 // pred_region
      %115 = dma.done [#allocation12], 16
    $region57: #{tpu_custom_call.1} parent=1 // pred_fallthru
      _
    %v117 = vld [vmem:[#allocation2] sm:$0xf]
    %v118 = vld [vmem:[#allocation2 + $0x4] sm:$0xf]
    %v119 = vld [vmem:[#allocation5] sm:$0xf]
    %v120 = vld [vmem:[#allocation5 + $0x4] sm:$0xf]
    %v121 = vld [vmem:[#allocation7] sm:$0x1]
    %v123 = vlaneseq
    %v124 = vshrl.u32 %v123, 7
    %v125 = vsub.s32 0, %v124
    %v126 = vrot.slane %v121, %v125
    %v130 = vunpack.c.l.b16 %v117
    %v131 = vunpack.c.l.b16 %v118
    %v132 = vpack.c.b16 %v131, %v130
    %v135 = vunpack.c.l.b16 %v119
    %v136 = vunpack.c.l.b16 %v120
    %v137 = vpack.c.b16 %v136, %v135
    %vm139 = vcmask 130048
    %v141 = vsel %vm139, %v132, 0
    %143 = vmatprep.subr.bf16.mxu0 0
    %144 = vmatpush1.bf16.msra.mxu0 %v137
    %145 = vmatprep.subr.bf16.mxu0 0
    %146 = vmatpush1.bf16.msra.mxu0 0
    %147 = vmatprep.subr.bf16.mxu0 0
    %148 = vmatpush1.bf16.msra.mxu0 0
    %149 = vmatprep.subr.bf16.mxu0 0
    %150 = vmatpush1.bf16.msra.mxu0 0
    %151 = vmatprep.subr.bf16.mxu0 0
    %152 = vmatpush1.bf16.msra.mxu0 0
    %153 = vmatprep.subr.bf16.mxu0 0
    %154 = vmatpush1.bf16.msra.mxu0 0
    %155 = vmatprep.subr.bf16.mxu0 0
    %156 = vmatpush1.bf16.msra.mxu0 0
    %157 = vmatprep.subr.bf16.mxu0 0
    %158 = vmatpush1.bf16.msra.mxu0 0
    %159 = vmatprep.subr.bf16.mxu0 0
    %160 = vmatpush1.bf16.msra.mxu0 0
    %161 = vmatprep.subr.bf16.mxu0 0
    %162 = vmatpush1.bf16.msra.mxu0 0
    %163 = vmatprep.subr.bf16.mxu0 0
    %164 = vmatpush1.bf16.msra.mxu0 0
    %165 = vmatprep.subr.bf16.mxu0 0
    %166 = vmatpush1.bf16.msra.mxu0 0
    %167 = vmatprep.subr.bf16.mxu0 0
    %168 = vmatpush1.bf16.msra.mxu0 0
    %169 = vmatprep.subr.bf16.mxu0 0
    %170 = vmatpush1.bf16.msra.mxu0 0
    %171 = vmatprep.subr.bf16.mxu0 0
    %172 = vmatpush1.bf16.msra.mxu0 0
    %173 = vmatprep.subr.bf16.mxu0 0
    %174 = vmatpush1.bf16.msra.mxu0 0
    %175 = vmatprep.mubr.bf16.mxu0 0
    %176 = vmatmul.mubr.bf16.gmra.mrb[0].mxu0 %v141
    %v177 = vpop.f32.mrb[0].mxu0
    %v178 = vadd.f32 %v126, %v177
    %v179 = vpop.f32.mrb[0].mxu0
    %v180 = vpop.f32.mrb[0].mxu0
    %v181 = vadd.f32 %v126, %v180
    %v182 = vpop.f32.mrb[0].mxu0
    %183 = vdwg.mxu0
    %v184 = vmax.f32 %v178, 0.0
    %v185 = vmax.f32 %v181, 0.0
    %v186 = vpack.c.bf16 %v185, %v184
    %v187 = vld [vmem:[#allocation8] sm:$0xf]
    %v188 = vld [vmem:[#allocation8 + $0x4] sm:$0xf]
    %v189 = vld [vmem:[#allocation8 + $0x8] sm:$0xf]
    %v190 = vld [vmem:[#allocation8 + $0xc] sm:$0xf]
    %v191 = vld [vmem:[#allocation10] sm:$0x1]
    %v193 = vlaneseq
    %v194 = vshrl.u32 %v193, 7
    %v195 = vsub.s32 0, %v194
    %v196 = vrot.slane %v191, %v195
    %v202 = vunpack.c.l.b16 %v187
    %v203 = vunpack.c.l.b16 %v188
    %v204 = vunpack.c.l.b16 %v189
    %v205 = vunpack.c.l.b16 %v190
    %v206 = vpack.c.b16 %v203, %v202
    %v207 = vpack.c.b16 %v205, %v204
    %vm210 = vcmask 261120
    %v212 = vsel %vm210, %v186, 0
    %214 = vmatprep.subr.bf16.mxu0 0
    %215 = vmatpush1.bf16.msra.mxu0 %v206
    %216 = vmatprep.subr.bf16.mxu0 0
    %217 = vmatpush1.bf16.msra.mxu0 %v207
    %218 = vmatprep.subr.bf16.mxu0 0
    %219 = vmatpush1.bf16.msra.mxu0 0
    %220 = vmatprep.subr.bf16.mxu0 0
    %221 = vmatpush1.bf16.msra.mxu0 0
    %222 = vmatprep.subr.bf16.mxu0 0
    %223 = vmatpush1.bf16.msra.mxu0 0
    %224 = vmatprep.subr.bf16.mxu0 0
    %225 = vmatpush1.bf16.msra.mxu0 0
    %226 = vmatprep.subr.bf16.mxu0 0
    %227 = vmatpush1.bf16.msra.mxu0 0
    %228 = vmatprep.subr.bf16.mxu0 0
    %229 = vmatpush1.bf16.msra.mxu0 0
    %230 = vmatprep.subr.bf16.mxu0 0
    %231 = vmatpush1.bf16.msra.mxu0 0
    %232 = vmatprep.subr.bf16.mxu0 0
    %233 = vmatpush1.bf16.msra.mxu0 0
    %234 = vmatprep.subr.bf16.mxu0 0
    %235 = vmatpush1.bf16.msra.mxu0 0
    %236 = vmatprep.subr.bf16.mxu0 0
    %237 = vmatpush1.bf16.msra.mxu0 0
    %238 = vmatprep.subr.bf16.mxu0 0
    %239 = vmatpush1.bf16.msra.mxu0 0
    %240 = vmatprep.subr.bf16.mxu0 0
    %241 = vmatpush1.bf16.msra.mxu0 0
    %242 = vmatprep.subr.bf16.mxu0 0
    %243 = vmatpush1.bf16.msra.mxu0 0
    %244 = vmatprep.subr.bf16.mxu0 0
    %245 = vmatpush1.bf16.msra.mxu0 0
    %246 = vmatprep.mubr.bf16.mxu0 0
    %247 = vmatmul.mubr.bf16.gmra.mrb[0].mxu0 %v212
    %v248 = vpop.f32.mrb[0].mxu0
    %v249 = vadd.f32 %v196, %v248
    %v250 = vpop.f32.mrb[0].mxu0
    %v251 = vpop.f32.mrb[0].mxu0
    %v252 = vadd.f32 %v196, %v251
    %v253 = vpop.f32.mrb[0].mxu0
    %254 = vdwg.mxu0
    %v255 = vmax.f32 %v249, 0.0
    %v256 = vmax.f32 %v252, 0.0
    %v257 = vpack.c.bf16 %v256, %v255
    %v258 = vld [vmem:[#allocation11] sm:$0xf]
    %v259 = vld [vmem:[#allocation11 + $0x4] sm:$0xf]
    %v260 = vld [vmem:[#allocation13] sm:$0x1]
    %v262 = vlaneseq
    %v263 = vshrl.u32 %v262, 7
    %v264 = vsub.s32 0, %v263
    %v265 = vrot.slane %v260, %v264
    %v269 = vunpack.c.l.b16 %v258
    %v270 = vunpack.c.l.b16 %v259
    %v271 = vpack.c.b16 %v270, %v269
    %v274 = vsel %vm139, %v257, 0
    %276 = vmatprep.subr.bf16.mxu0 0
    %277 = vmatpush1.bf16.msra.mxu0 %v271
    %278 = vmatprep.subr.bf16.mxu0 0
    %279 = vmatpush1.bf16.msra.mxu0 0
    %280 = vmatprep.subr.bf16.mxu0 0
    %281 = vmatpush1.bf16.msra.mxu0 0
    %282 = vmatprep.subr.bf16.mxu0 0
    %283 = vmatpush1.bf16.msra.mxu0 0
    %284 = vmatprep.subr.bf16.mxu0 0
    %285 = vmatpush1.bf16.msra.mxu0 0
    %286 = vmatprep.subr.bf16.mxu0 0
    %287 = vmatpush1.bf16.msra.mxu0 0
    %288 = vmatprep.subr.bf16.mxu0 0
    %289 = vmatpush1.bf16.msra.mxu0 0
    %290 = vmatprep.subr.bf16.mxu0 0
    %291 = vmatpush1.bf16.msra.mxu0 0
    %292 = vmatprep.subr.bf16.mxu0 0
    %293 = vmatpush1.bf16.msra.mxu0 0
    %294 = vmatprep.subr.bf16.mxu0 0
    %295 = vmatpush1.bf16.msra.mxu0 0
    %296 = vmatprep.subr.bf16.mxu0 0
    %297 = vmatpush1.bf16.msra.mxu0 0
    %298 = vmatprep.subr.bf16.mxu0 0
    %299 = vmatpush1.bf16.msra.mxu0 0
    %300 = vmatprep.subr.bf16.mxu0 0
    %301 = vmatpush1.bf16.msra.mxu0 0
    %302 = vmatprep.subr.bf16.mxu0 0
    %303 = vmatpush1.bf16.msra.mxu0 0
    %304 = vmatprep.subr.bf16.mxu0 0
    %305 = vmatpush1.bf16.msra.mxu0 0
    %306 = vmatprep.subr.bf16.mxu0 0
    %307 = vmatpush1.bf16.msra.mxu0 0
    %308 = vmatprep.mubr.bf16.mxu0 0
    %309 = vmatmul.mubr.bf16.gmra.mrb[0].mxu0 %v274
    %v310 = vpop.f32.mrb[0].mxu0
    %v311 = vadd.f32 %v265, %v310
    %v312 = vpop.f32.mrb[0].mxu0
    %v313 = vpop.f32.mrb[0].mxu0
    %v314 = vadd.f32 %v265, %v313
    %v315 = vpop.f32.mrb[0].mxu0
    %316 = vdwg.mxu0
    %317 = vst [vmem:[#allocation14] sm:$0xff] %v311
    %318 = vst [vmem:[#allocation14 + $0x8] sm:$0xff] %v314
    // Predicated region
    $region58: #{tpu_custom_call.1} parent=1 // pred_check
      _
    $region59: #{tpu_custom_call.1} parent=1 // pred_check_branch
      %320 = sbr.rel (0) target = $region61
    $region60: #{tpu_custom_call.1} parent=1 // pred_region
      %s322 = ssub.s32 256, 256
      %323 = vsyncadd [#allocation4], %s322
      %s324 = sshll.u32 [#allocation14], 4
      %s325 = int_to_ptr.vmem [resolvable:$true] %s324
      %330 = dma.vmem_to_hbm [thread:$0]  %s325, 256, %s7, [#allocation4], 128, 128, 8
    $region61: #{tpu_custom_call.1} parent=1 // pred_fallthru
      _
    // Predicated region
    $region62: #{tpu_custom_call.1} parent=1 // pred_check
      _
    $region63: #{tpu_custom_call.1} parent=1 // pred_check_branch
      %332 = sbr.rel (0) target = $region65
    $region64: #{tpu_custom_call.1} parent=1 // pred_region
      %333 = dma.done [#allocation4], 256
    $region65: #{tpu_custom_call.1} parent=1 // pred_fallthru
      _
    %334 = vsyncpa [#allocation3], 1
    %335 = vsyncpa [#allocation6], 1
    %336 = vsyncpa [#allocation9], 1
    %337 = vsyncpa [#allocation12], 1
    %338 = vsyncpa [#allocation4], 1

</llo_original>
